<compile_context>
chip_gen: v5e
topology: v5e:2x2
jax: 0.10.0
libtpu: 0.0.40
codegen_flags: <defaults>
</compile_context>

<pallas_src>
import jax
import jax.numpy as jnp
from jax import lax
from jax.experimental import pallas as pl
from jax.experimental.pallas import tpu as pltpu


def channel_pool_kernel(x_ref, o_ref):
    # x_ref: (1, C, T) VMEM tile; o_ref: (1, 2, T) VMEM tile.
    C = x_ref.shape[1]
    inv_c = 1.0 / C

    # Channel 0 initializes both accumulators (f32 accumulation for the mean;
    # per-slab cast keeps vreg pressure flat, important on v5e w/o bf16 VALU).
    x0 = x_ref[0, pl.ds(0, 1), :].astype(jnp.float32)  # (1, T)

    if C <= 32:
        # Small channel count: fully unrolled Python loop (static slices).
        mx, sm = x0, x0
        for c in range(1, C):
            xc = x_ref[0, pl.ds(c, 1), :].astype(jnp.float32)
            mx = jnp.maximum(mx, xc)
            sm = sm + xc
    else:
        # Large channel count: stream over C, keep only ~3 slabs live.
        def body(c, carry):
            mx_acc, sm_acc = carry
            xc = x_ref[0, pl.ds(c, 1), :].astype(jnp.float32)
            return jnp.maximum(mx_acc, xc), sm_acc + xc

        mx, sm = lax.fori_loop(1, C, body, (x0, x0))

    # Direct per-channel stores (no concatenate / extra VMEM copy).
    o_ref[0, pl.ds(0, 1), :] = mx.astype(o_ref.dtype)
    o_ref[0, pl.ds(1, 1), :] = (sm * inv_c).astype(o_ref.dtype)


def _pick_spatial_tile(hw, c, itemsize, n):
    """Pick a lane-dense spatial tile that divides hw and keeps the
    double-buffered input working set small (VMEM-safe on v7x's 64 MiB)."""
    if hw % 128 != 0:
        # Fallback: block dim equal to the full array dim is always legal.
        return hw
    budget = 8 * 1024 * 1024  # 2 input buffers must stay well under this
    tile = 128
    for cand in (2048, 1024, 512, 256, 128):
        if hw % cand == 0 and 2 * c * cand * itemsize <= budget:
            tile = cand
            break
    # Make sure the grid exposes >= 2 parallel steps when possible
    # (v7x has 2 TensorCores; with N == 1 one TC would otherwise idle).
    while (n * (hw // tile) < 2 and tile > 128
           and (tile // 2) % 128 == 0 and hw % (tile // 2) == 0):
        tile //= 2
    return tile


def channel_pool(x):
    """x: (N, C, H, W) -> (N, 2, H, W): [max over C, mean over C]."""
    N, C, H, W = x.shape
    hw = H * W
    x2 = x.reshape(N, C, hw)  # lane-dense last dim (wrapper-side layout plumbing)

    tile = _pick_spatial_tile(hw, C, jnp.dtype(x.dtype).itemsize, N)
    grid = (N, hw // tile)

    out = pl.pallas_call(
        channel_pool_kernel,
        out_shape=jax.ShapeDtypeStruct((N, 2, hw), x.dtype),
        grid_spec=pltpu.PrefetchScalarGridSpec(
            num_scalar_prefetch=0,
            grid=grid,
            in_specs=[
                pl.BlockSpec((1, C, tile), lambda n, s: (n, 0, s)),
            ],
            out_specs=pl.BlockSpec((1, 2, tile), lambda n, s: (n, 0, s)),
        ),
        compiler_params=pltpu.CompilerParams(
            dimension_semantics=("parallel", "parallel"),
        ),
    )(x2)

    return out.reshape(N, 2, H, W)


if __name__ == "__main__":
    key = jax.random.PRNGKey(0)
    N, C, H, W = 2, 4, 16, 16
    x = jax.random.normal(key, (N, C, H, W), dtype=jnp.float32)

    out = channel_pool(x)
    out = jax.block_until_ready(out)

    # Reference check in plain JAX (mirrors the PyTorch forward).
    ref = jnp.concatenate(
        [jnp.max(x, axis=1, keepdims=True), jnp.mean(x, axis=1, keepdims=True)],
        axis=1,
    )
    assert out.shape == (N, 2, H, W), out.shape
    assert jnp.allclose(out, ref, atol=1e-6, rtol=1e-6), "mismatch vs reference"

    print("KERNEL_OK")
</pallas_src>

<mosaic_0001>
module attributes {stable_mosaic.version = 11 : i64} {
  func.func @channel_pool_kernel(%arg0: i32, %arg1: i32, %arg2: memref<1x4x256xf32, #tpu.memory_space<vmem>>, %arg3: memref<1x2x256xf32, #tpu.memory_space<vmem>>) attributes {dimension_semantics = [#tpu.dimension_semantics<parallel>, #tpu.dimension_semantics<parallel>], iteration_bounds = array<i64: 2, 1>, scalar_prefetch = 0 : i64, scratch_operands = 0 : i64, tpu.core_type = #tpu.core_type<tc>, window_params = [{transform_indices = @transform_0, window_bounds = array<i64: 1, 4, 256>}, {transform_indices = @transform_1, window_bounds = array<i64: 1, 2, 256>}]} {
    %c0 = arith.constant 0 : index
    %c0_0 = arith.constant 0 : index
    %c0_1 = arith.constant 0 : index
    %0 = vector.load %arg2[%c0, %c0_0, %c0_1] : memref<1x4x256xf32, #tpu.memory_space<vmem>>, vector<1x1x256xf32>
    %1 = vector.shape_cast %0 : vector<1x1x256xf32> to vector<1x256xf32>
    %c0_2 = arith.constant 0 : index
    %c1 = arith.constant 1 : index
    %c0_3 = arith.constant 0 : index
    %2 = vector.load %arg2[%c0_2, %c1, %c0_3] : memref<1x4x256xf32, #tpu.memory_space<vmem>>, vector<1x1x256xf32>
    %3 = vector.shape_cast %2 : vector<1x1x256xf32> to vector<1x256xf32>
    %4 = arith.maximumf %1, %3 : vector<1x256xf32>
    %5 = arith.addf %1, %3 : vector<1x256xf32>
    %c0_4 = arith.constant 0 : index
    %c2 = arith.constant 2 : index
    %c0_5 = arith.constant 0 : index
    %6 = vector.load %arg2[%c0_4, %c2, %c0_5] : memref<1x4x256xf32, #tpu.memory_space<vmem>>, vector<1x1x256xf32>
    %7 = vector.shape_cast %6 : vector<1x1x256xf32> to vector<1x256xf32>
    %8 = arith.maximumf %4, %7 : vector<1x256xf32>
    %9 = arith.addf %5, %7 : vector<1x256xf32>
    %c0_6 = arith.constant 0 : index
    %c3 = arith.constant 3 : index
    %c0_7 = arith.constant 0 : index
    %10 = vector.load %arg2[%c0_6, %c3, %c0_7] : memref<1x4x256xf32, #tpu.memory_space<vmem>>, vector<1x1x256xf32>
    %11 = vector.shape_cast %10 : vector<1x1x256xf32> to vector<1x256xf32>
    %12 = arith.maximumf %8, %11 : vector<1x256xf32>
    %13 = arith.addf %9, %11 : vector<1x256xf32>
    %c0_8 = arith.constant 0 : index
    %c0_9 = arith.constant 0 : index
    %c0_10 = arith.constant 0 : index
    %14 = vector.load %arg3[%c0_8, %c0_9, %c0_10] : memref<1x2x256xf32, #tpu.memory_space<vmem>>, vector<1x1x256xf32>
    %15 = vector.shape_cast %14 : vector<1x1x256xf32> to vector<1x256xf32>
    %16 = vector.shape_cast %12 : vector<1x256xf32> to vector<1x1x256xf32>
    tpu.vector_store %arg3[%c0_8, %c0_9, %c0_10], %16 {strides = array<i32>} : memref<1x2x256xf32, #tpu.memory_space<vmem>>, vector<1x1x256xf32>,
    %cst = arith.constant 2.500000e-01 : f32
    %17 = vector.broadcast %cst : f32 to vector<1x256xf32>
    %18 = arith.mulf %13, %17 : vector<1x256xf32>
    %c0_11 = arith.constant 0 : index
    %c1_12 = arith.constant 1 : index
    %c0_13 = arith.constant 0 : index
    %19 = vector.load %arg3[%c0_11, %c1_12, %c0_13] : memref<1x2x256xf32, #tpu.memory_space<vmem>>, vector<1x1x256xf32>
    %20 = vector.shape_cast %19 : vector<1x1x256xf32> to vector<1x256xf32>
    %21 = vector.shape_cast %18 : vector<1x256xf32> to vector<1x1x256xf32>
    tpu.vector_store %arg3[%c0_11, %c1_12, %c0_13], %21 {strides = array<i32>} : memref<1x2x256xf32, #tpu.memory_space<vmem>>, vector<1x1x256xf32>,
    return
  }
  func.func @transform_0(%arg0: i32, %arg1: i32) -> (i32, i32, i32) {
    %c0_i32 = arith.constant 0 : i32
    %c0_i32_0 = arith.constant 0 : i32
    return %arg0, %c0_i32, %arg1 : i32, i32, i32
  }
  func.func @transform_1(%arg0: i32, %arg1: i32) -> (i32, i32, i32) {
    %c0_i32 = arith.constant 0 : i32
    %c0_i32_0 = arith.constant 0 : i32
    return %arg0, %c0_i32, %arg1 : i32, i32, i32
  }
}

</mosaic_0001>

<llo_original>
// kernel: tpu_custom_call.1
$region0: #{tpu_custom_call.1}
  #allocation0 [shape = 'u32[]', space=smem, size = 0x4, offset = 0x4, fixed_abs, tag = 'smem constant byte address 0x4 - core index']
  #allocation1 [shape = 'u32[72,128]{1,0:T(1,128)}', space=vmem, size = 0x9000, scoped, tag = 'internal scratch']
  %s0 = inlined_call_operand.hbm [shape: f32[2,4,256], index: 0, kind: input, shape index: {}]
  %s1 = inlined_call_operand.hbm [shape: f32[2,2,256], index: 1, kind: output, shape index: {}]
  %s2 = sld [smem:[#allocation0]]
  $region41: #{tpu_custom_call.1} parent=0
    _
  %s4 = ssub.s32 1, %s2
  %s5 = scalar_select 0, %s4, %s2
  $region1: #{tpu_custom_call.1} parent=0
    #allocation2 [shape = 'u8[8192]{0}', space=vmem, size = 0x2000, scoped, tag = 'input window, operand 0']
    #allocation3 [shape = 's32[2]{0}', space=sflag, size = 0x8, scoped, tag = 'scoped memory for tpu_custom_call.1']
    #allocation4 [shape = 's32[2]{0}', space=sflag, size = 0x8, scoped, tag = 'scoped memory for tpu_custom_call.1']
    #allocation5 [shape = 'u8[4096]{0}', space=vmem, size = 0x1000, scoped, tag = 'output window, operand 0']
    %6 = vsyncpa [#allocation3], 0
    %s7 = scalar_lea.sflag [#allocation3], 1
    %8 = vsyncpa %s7, 0
    %9 = vsyncpa [#allocation4], 0
    %s10 = scalar_lea.sflag [#allocation4], 1
    %11 = vsyncpa %s10, 0
    loop: start=0, step=1, limit=4
    $region2: #{tpu_custom_call.1} parent=1 // loop_pre_header
      _
    $region3: #{tpu_custom_call.1} parent=1 // loop_header
      %s13 = sphi 0, %s17
      %p14 = scmp.ge.s32.totalorder %s13, 4
      %s20 = sphi 0, %s32
      %s21 = sphi 0, %s28
      %s22 = sphi 0, %s20
      %s23 = sphi 0, %s21
      %s24 = sphi 0, %s22
      %s25 = sphi 0, %s23
      %s37 = sphi 0, %s39
      %s40 = sphi 0, %s37
      %s41 = sphi 0, %s40
      %s57 = sphi 0, %s41
      %s65 = sphi 0, %s67
      %s68 = sphi 0, %s65
      %s69 = sphi 0, %s68
      %s85 = sphi 0, %s69
    $region4: #{tpu_custom_call.1} parent=1 // loop_header_branch
      %16 = sbr.rel (%p14) target = $region8
    $region5: #{tpu_custom_call.1} parent=1 // loop_body
      %s18 = ssub.s32 %s13, 1
      %s19 = ssub.s32 %s13, 2
      %s26 = sadd.s32 1, %s21
      %p27 = scmp.ge.s32.totalorder %s26, 1
      %s28 = scalar_select %p27, 0, %s26
      %s29 = sadd.s32 1, %s20
      %s30 = scalar_select %p27, %s29, %s20
      %p31 = scmp.ge.s32.totalorder %s30, 2
      %s32 = scalar_select %p31, 0, %s30
      %s33 = ssub.s32 %s20, %s32
      %s34 = ssub.s32 %s21, %s28
      %s35 = sor.u32 %s33, %s34
      %p36 = scmp.eq.s32.totalorder %s35, 0
      %s38 = sadd.s32 %s37, 1
      %s39 = scalar_select %p36, %s37, %s38
      %p42 = pneg %p36
      %p43 = scmp.eq.s32.totalorder %s13, 1
      %p44 = por %p42, %p43
      %p45 = scmp.ne.s32.totalorder %s37, %s40
      %p46 = scmp.eq.s32.totalorder %s13, 0
      %p47 = por %p45, %p46
      %p48 = scmp.ne.s32.totalorder %s37, %s40
      %p49 = scmp.eq.s32.totalorder %s18, 1
      %p50 = por %p48, %p49
      %p51 = scmp.ne.s32.totalorder %s40, %s41
      %p52 = scmp.eq.s32.totalorder %s18, 0
      %p53 = por %p51, %p52
      %p54 = scmp.ne.s32.totalorder %s40, %s41
      %p55 = scmp.eq.s32.totalorder %s19, 1
      %p56 = por %p54, %p55
      %p58 = scmp.ne.s32.totalorder %s41, %s57
      %p59 = scmp.eq.s32.totalorder %s19, 0
      %p60 = por %p58, %p59
      %s61 = ssub.s32 %s20, %s32
      %s62 = ssub.s32 %s21, %s28
      %s63 = sor.u32 %s61, %s62
      %p64 = scmp.eq.s32.totalorder %s63, 0
      %s66 = sadd.s32 %s65, 1
      %s67 = scalar_select %p64, %s65, %s66
      %p70 = pneg %p64
      %p71 = scmp.eq.s32.totalorder %s13, 1
      %p72 = por %p70, %p71
      %p73 = scmp.ne.s32.totalorder %s65, %s68
      %p74 = scmp.eq.s32.totalorder %s13, 0
      %p75 = por %p73, %p74
      %p76 = scmp.ne.s32.totalorder %s65, %s68
      %p77 = scmp.eq.s32.totalorder %s18, 1
      %p78 = por %p76, %p77
      %p79 = scmp.ne.s32.totalorder %s68, %s69
      %p80 = scmp.eq.s32.totalorder %s18, 0
      %p81 = por %p79, %p80
      %p82 = scmp.ne.s32.totalorder %s68, %s69
      %p83 = scmp.eq.s32.totalorder %s19, 1
      %p84 = por %p82, %p83
      %p86 = scmp.ne.s32.totalorder %s69, %s85
      %p87 = scmp.eq.s32.totalorder %s19, 0
      %p88 = por %p86, %p87
      %p89 = scmp.le.s32.totalorder 1, %s13
      %p90 = scmp.lt.s32.totalorder %s13, 3
      %p91 = pnand %p89, %p90
      %p92 = pneg %p91
      // Predicated region
      $region9: #{tpu_custom_call.1} parent=5 // pred_check
        _
      $region10: #{tpu_custom_call.1} parent=5 // pred_check_branch
        %94 = sbr.rel (%p91) target = $region12
      $region11: #{tpu_custom_call.1} parent=5 // pred_region
        %s95 = ssub.s32 %s13, 1
      $region12: #{tpu_custom_call.1} parent=5 // pred_fallthru
        _
      %p96 = scmp.lt.s32.totalorder %s13, 2
      // Predicated region
      $region13: #{tpu_custom_call.1} parent=5 // pred_check
        %p97 = pneg %p96
      $region14: #{tpu_custom_call.1} parent=5 // pred_check_branch
        %99 = sbr.rel (%p97) target = $region16
      $region15: #{tpu_custom_call.1} parent=5 // pred_region
        // Predicated region
        $region17: #{tpu_custom_call.1} parent=15 // pred_check
          %p100 = pneg %p47
        $region18: #{tpu_custom_call.1} parent=15 // pred_check_branch
          %102 = sbr.rel (%p100) target = $region20
        $region19: #{tpu_custom_call.1} parent=15 // pred_region
          %s103 = sand.u32 %s37, 1
          %s104 = scalar_lea.sflag [#allocation3], %s103
          %s105 = sand.u32 %s37, 1
          %s106 = smul.addr %s105, 8
          %s107 = scalar_lea.vmem [#allocation2], %s106
          %s108 = smul.u32 2, %s21
          %110 = vsyncadd %s104, 0
          %s111 = smul.addr %s20, 2
          %s112 = sadd.s32 %s108, %s111
          %s113 = smul.addr %s112, 4
          %s114 = scalar_lea.hbm %s0, %s113
          %s116 = sshll.u32 %s114, 4
          %s117 = int_to_ptr.hbm [resolvable:$true] %s116
          %s118 = sshll.u32 %s107, 4
          %s119 = int_to_ptr.vmem [resolvable:$true] %s118
          %121 = dma.hbm_to_vmem [thread:$0]  %s117, 128, %s119, %s104
        $region20: #{tpu_custom_call.1} parent=15 // pred_fallthru
          _
      $region16: #{tpu_custom_call.1} parent=5 // pred_fallthru
        _
      %p122 = scmp.le.s32.totalorder 1, %s13
      %p123 = scmp.lt.s32.totalorder %s13, 3
      %p124 = pnand %p122, %p123
      %p125 = pneg %p124
      // Predicated region
      $region21: #{tpu_custom_call.1} parent=5 // pred_check
        _
      $region22: #{tpu_custom_call.1} parent=5 // pred_check_branch
        %127 = sbr.rel (%p124) target = $region24
      $region23: #{tpu_custom_call.1} parent=5 // pred_region
        %s128 = ssub.s32 %s13, 1
        %s129 = sand.u32 %s40, 1
        %s130 = scalar_lea.sflag [#allocation3], %s129
        %s131 = sand.u32 %s40, 1
        %s132 = smul.addr %s131, 8
        %s133 = scalar_lea.vmem [#allocation2], %s132
        // Predicated region
        $region25: #{tpu_custom_call.1} parent=23 // pred_check
          %p134 = pneg %p53
        $region26: #{tpu_custom_call.1} parent=23 // pred_check_branch
          %136 = sbr.rel (%p134) target = $region28
        $region27: #{tpu_custom_call.1} parent=23 // pred_region
          %138 = dma.done %s130, 128
        $region28: #{tpu_custom_call.1} parent=23 // pred_fallthru
          _
        %s139 = sand.u32 %s40, 1
        %s140 = scalar_lea.sflag [#allocation3], %s139
        %s141 = sand.u32 %s40, 1
        %s142 = smul.addr %s141, 8
        %s143 = scalar_lea.vmem [#allocation2], %s142
        %p144 = pneg %p53
        %p145 = pneg %p50
        %p146 = pneg %p81
        %p147 = pneg %p78
        %s148 = sand.u32 %s68, 1
        %s149 = scalar_lea.sflag [#allocation4], %s148
        %s150 = sand.u32 %s68, 1
        %s151 = smul.addr %s150, 4
        %s152 = scalar_lea.vmem [#allocation5], %s151
        %s153 = smul.u32 2, %s23
        %s154 = smul.u32 2, %s23
        %v155 = vld [vmem:[%s133] ss:$4 sm:$0x3]
        %s156 = scalar_lea.vmem %s133, 1 [#allocation2]
        %v157 = vld [vmem:[%s156] ss:$4 sm:$0x3]
        %v158 = vmax.f32 %v155, %v157
        %v159 = vadd.f32 %v155, %v157
        %s160 = scalar_lea.vmem %s133, 2 [#allocation2]
        %v161 = vld [vmem:[%s160] ss:$4 sm:$0x3]
        %v162 = vmax.f32 %v158, %v161
        %v163 = vadd.f32 %v159, %v161
        %s164 = scalar_lea.vmem %s133, 3 [#allocation2]
        %v165 = vld [vmem:[%s164] ss:$4 sm:$0x3]
        %v166 = vmax.f32 %v162, %v165
        %v167 = vadd.f32 %v163, %v165
        %v168 = vlaneseq
        %vm169 = vcmp.ge.s32.totalorder %v168, 0
        %vm170 = vcmp.lt.s32.totalorder %v168, 256
        %vm171 = vmand %vm169, %vm170
        %172 = vst.msk [vmem:[%s152] ss:$2 sm:$0x3] %vm171, %v166
        %v173 = vmul.f32 %v167, 0.25
        %s174 = scalar_lea.vmem %s152, 1 [#allocation5]
        %175 = vst.msk [vmem:[%s174] ss:$2 sm:$0x3] %vm171, %v173
        %s176 = sand.u32 %s68, 1
        %s177 = scalar_lea.sflag [#allocation4], %s176
        %s178 = sand.u32 %s68, 1
        %s179 = smul.addr %s178, 4
        %s180 = scalar_lea.vmem [#allocation5], %s179
        // Predicated region
        $region29: #{tpu_custom_call.1} parent=23 // pred_check
          %p181 = pneg %p78
        $region30: #{tpu_custom_call.1} parent=23 // pred_check_branch
          %183 = sbr.rel (%p181) target = $region32
        $region31: #{tpu_custom_call.1} parent=23 // pred_region
          %s184 = smul.u32 2, %s23
          %186 = vsyncadd %s177, 0
          %s187 = smul.addr %s22, 2
          %s188 = sadd.s32 %s184, %s187
          %s189 = smul.addr %s188, 2
          %s190 = scalar_lea.hbm %s1, %s189
          %s192 = sshll.u32 %s180, 4
          %s193 = int_to_ptr.vmem [resolvable:$true] %s192
          %s194 = sshll.u32 %s190, 4
          %s195 = int_to_ptr.hbm [resolvable:$true] %s194
          %197 = dma.vmem_to_hbm [thread:$0]  %s193, 64, %s195, %s177
        $region32: #{tpu_custom_call.1} parent=23 // pred_fallthru
          _
      $region24: #{tpu_custom_call.1} parent=5 // pred_fallthru
        _
      %p198 = scmp.le.s32.totalorder 2, %s13
      // Predicated region
      $region33: #{tpu_custom_call.1} parent=5 // pred_check
        %p199 = pneg %p198
      $region34: #{tpu_custom_call.1} parent=5 // pred_check_branch
        %201 = sbr.rel (%p199) target = $region36
      $region35: #{tpu_custom_call.1} parent=5 // pred_region
        %s202 = ssub.s32 %s13, 2
        // Predicated region
        $region37: #{tpu_custom_call.1} parent=35 // pred_check
          %p203 = pneg %p84
        $region38: #{tpu_custom_call.1} parent=35 // pred_check_branch
          %205 = sbr.rel (%p203) target = $region40
        $region39: #{tpu_custom_call.1} parent=35 // pred_region
          %s206 = sand.u32 %s69, 1
          %s207 = scalar_lea.sflag [#allocation4], %s206
          %s208 = sand.u32 %s69, 1
          %s209 = smul.addr %s208, 4
          %s210 = scalar_lea.vmem [#allocation5], %s209
          %212 = dma.done %s207, 64
        $region40: #{tpu_custom_call.1} parent=35 // pred_fallthru
          _
      $region36: #{tpu_custom_call.1} parent=5 // pred_fallthru
        _
    $region6: #{tpu_custom_call.1} parent=1 // loop_footer
      %s17 = sadd.s32 1, %s13
    $region7: #{tpu_custom_call.1} parent=1 // loop_footer_branch
      %12 = sbr.rel target = $region3
    $region8: #{tpu_custom_call.1} parent=1 // loop_exit
      _
    %213 = vsyncpa [#allocation3], 1
    %s214 = scalar_lea.sflag [#allocation3], 1
    %215 = vsyncpa %s214, 1
    %216 = vsyncpa [#allocation4], 1
    %s217 = scalar_lea.sflag [#allocation4], 1
    %218 = vsyncpa %s217, 1

</llo_original>
